<compile_context>
chip_gen: v7x
topology: tpu7x:2x2x1
jax: 0.10.0
libtpu: 0.0.40
codegen_flags: <defaults>
</compile_context>

<pallas_src>
import jax
import jax.numpy as jnp
from jax.experimental import pallas as pl
from jax.experimental.pallas import tpu as pltpu


def _round_up(x, m):
    return ((x + m - 1) // m) * m


def _cdiv(a, b):
    return -(-a // b)


def _mlp_kernel(p_ref, x_ref, o_ref):
    # p_ref: SMEM (9,) f32 = [w1_00, w1_01, w1_10, w1_11, b1_0, b1_1,
    #                         w2_0,  w2_1,  b2]       (PyTorch (out,in) order)
    # x_ref: VMEM (2, R_tile, 128) -- feature 0 / feature 1 planes, batch dense
    # o_ref: VMEM (R_tile, 128)    -- dense output block
    x0 = x_ref[0]  # (R_tile, 128)
    x1 = x_ref[1]  # (R_tile, 128)

    # fc1 + sigmoid (VPU FMAs, EUP exp)
    h0 = jax.nn.sigmoid(p_ref[0] * x0 + p_ref[1] * x1 + p_ref[4])
    h1 = jax.nn.sigmoid(p_ref[2] * x0 + p_ref[3] * x1 + p_ref[5])

    # fc2 + sigmoid
    o_ref[...] = jax.nn.sigmoid(p_ref[6] * h0 + p_ref[7] * h1 + p_ref[8])


def _choose_tiling(batch, max_rows_per_step=4096):
    """Pick (rows_per_tile, padded_row_groups, num_programs).

    One "row group" = 128 batch lanes. Tiles are multiples of 8 row groups
    (the (8,128) granule). max_rows_per_step=4096 -> 512K lanes / ~6 MiB of
    block data per grid step, ~12 MiB double-buffered in VMEM.
    """
    g = _cdiv(batch, 128)                              # row groups needed
    # >=2 programs when there is enough work (use both v7x TensorCores);
    # otherwise a single small tile.
    n = max(_cdiv(g, max_rows_per_step), 2 if g >= 16 else 1)
    r_tile = _round_up(_cdiv(g, n), 8)
    g_pad = n * r_tile
    return r_tile, g_pad, n


def mlp_forward(x, w1, b1, w2, b2, *, max_rows_per_step=4096):
    """x: (B, 2) float32. Weights in PyTorch convention: w1 (2,2), b1 (2,),
    w2 (1,2), b2 (1,). Returns (B,) float32, matching pred.view(-1)."""
    B = x.shape[0]

    params = jnp.concatenate(
        [w1.reshape(-1), b1.reshape(-1), w2.reshape(-1), b2.reshape(-1)]
    ).astype(jnp.float32)  # (9,)

    r_tile, g_pad, n = _choose_tiling(B, max_rows_per_step)
    B_pad = g_pad * 128

    # Feature-major, lane-dense layout: (2, g_pad, 128). Padded lanes compute
    # bias-only garbage that is sliced away below (no correctness impact).
    x_t = jnp.transpose(x.astype(jnp.float32))        # (2, B)
    if B_pad != B:
        x_t = jnp.pad(x_t, ((0, 0), (0, B_pad - B)))  # fuses with transpose
    x_t = x_t.reshape(2, g_pad, 128)                  # free contiguous reshape

    out = pl.pallas_call(
        _mlp_kernel,
        out_shape=jax.ShapeDtypeStruct((g_pad, 128), jnp.float32),
        grid=(n,),
        in_specs=[
            # 9 f32 scalars, whole array in SMEM (read as scalars in-kernel)
            pl.BlockSpec(memory_space=pltpu.MemorySpace.SMEM),
            # dense (2, r_tile, 128) input blocks, auto double-buffered
            pl.BlockSpec((2, r_tile, 128), lambda i: (0, i, 0)),
        ],
        out_specs=pl.BlockSpec((r_tile, 128), lambda i: (i, 0)),
        compiler_params=pltpu.CompilerParams(
            dimension_semantics=("parallel",),  # shard batch across TCs (v7x)
        ),
        cost_estimate=pl.CostEstimate(
            flops=12 * B_pad,            # 2x(2 mul + 2 add) + (2 mul + 2 add)
            transcendentals=3 * B_pad,   # 3 sigmoids per element
            bytes_accessed=12 * B_pad,   # 8 B in + 4 B out per element
        ),
    )(params, x_t)

    return out.reshape(-1)[:B]  # drop padding -> pred.view(-1)


def init_params(key):
    """Deterministic init mimicking PyTorch Linear default U(-1/sqrt(fan_in), ...)."""
    k1, k2, k3, k4 = jax.random.split(key, 4)
    bound = 1.0 / jnp.sqrt(2.0)
    w1 = jax.random.uniform(k1, (2, 2), jnp.float32, -bound, bound)  # (out, in)
    b1 = jax.random.uniform(k2, (2,), jnp.float32, -bound, bound)
    w2 = jax.random.uniform(k3, (1, 2), jnp.float32, -bound, bound)  # (out, in)
    b2 = jax.random.uniform(k4, (1,), jnp.float32, -bound, bound)
    return w1, b1, w2, b2


if __name__ == "__main__":
    key = jax.random.PRNGKey(0)
    kx, kp = jax.random.split(key)
    w1, b1, w2, b2 = init_params(kp)

    # Two batch sizes:
    #   B=300  -> single-program grid, padded-tail path
    #   B=2500 -> two-program grid (parallel semantics), padded-tail path
    for B in (300, 2500):
        x = jax.random.normal(jax.random.fold_in(kx, B), (B, 2), jnp.float32)

        pred = jax.block_until_ready(mlp_forward(x, w1, b1, w2, b2))

        # Reference in plain JAX (same math as the PyTorch forward).
        h_ref = jax.nn.sigmoid(x @ w1.T + b1)
        ref = jax.nn.sigmoid(h_ref @ w2.T + b2).reshape(-1)

        assert pred.shape == (B,), f"bad shape for B={B}: {pred.shape}"
        assert jnp.allclose(pred, ref, atol=1e-5, rtol=1e-5), f"mismatch at B={B}"

    print("KERNEL_OK")
</pallas_src>

<mosaic_0001>
module attributes {stable_mosaic.version = 11 : i64} {
  func.func @_mlp_kernel(%arg0: i32, %arg1: memref<9xf32, #tpu.memory_space<smem>>, %arg2: memref<2x8x128xf32, #tpu.memory_space<vmem>>, %arg3: memref<8x128xf32, #tpu.memory_space<vmem>>) attributes {dimension_semantics = [#tpu.dimension_semantics<parallel>], iteration_bounds = array<i64: 1>, scalar_prefetch = 0 : i64, scratch_operands = 0 : i64, tpu.core_type = #tpu.core_type<tc>, window_params = [{transform_indices = @transform_0, window_bounds = array<i64: 9>}, {transform_indices = @transform_1, window_bounds = array<i64: 2, 8, 128>}, {transform_indices = @transform_2, window_bounds = array<i64: 8, 128>}]} {
    %c0 = arith.constant 0 : index
    %c0_0 = arith.constant 0 : index
    %c0_1 = arith.constant 0 : index
    %0 = vector.load %arg2[%c0, %c0_0, %c0_1] : memref<2x8x128xf32, #tpu.memory_space<vmem>>, vector<1x8x128xf32>
    %1 = vector.shape_cast %0 : vector<1x8x128xf32> to vector<8x128xf32>
    %c1 = arith.constant 1 : index
    %c0_2 = arith.constant 0 : index
    %c0_3 = arith.constant 0 : index
    %2 = vector.load %arg2[%c1, %c0_2, %c0_3] : memref<2x8x128xf32, #tpu.memory_space<vmem>>, vector<1x8x128xf32>
    %3 = vector.shape_cast %2 : vector<1x8x128xf32> to vector<8x128xf32>
    %c0_4 = arith.constant 0 : index
    %4 = memref.load %arg1[%c0_4] : memref<9xf32, #tpu.memory_space<smem>>
    %5 = vector.broadcast %4 : f32 to vector<8x128xf32>
    %6 = arith.mulf %5, %1 : vector<8x128xf32>
    %c1_5 = arith.constant 1 : index
    %7 = memref.load %arg1[%c1_5] : memref<9xf32, #tpu.memory_space<smem>>
    %8 = vector.broadcast %7 : f32 to vector<8x128xf32>
    %9 = arith.mulf %8, %3 : vector<8x128xf32>
    %10 = arith.addf %6, %9 : vector<8x128xf32>
    %c4 = arith.constant 4 : index
    %11 = memref.load %arg1[%c4] : memref<9xf32, #tpu.memory_space<smem>>
    %12 = vector.broadcast %11 : f32 to vector<8x128xf32>
    %13 = arith.addf %10, %12 : vector<8x128xf32>
    %14 = arith.negf %13 : vector<8x128xf32>
    %15 = math.exp %14 : vector<8x128xf32>
    %cst = arith.constant 1.000000e+00 : f32
    %16 = vector.broadcast %cst : f32 to vector<8x128xf32>
    %17 = arith.addf %16, %15 : vector<8x128xf32>
    %18 = arith.divf %16, %17 : vector<8x128xf32>
    %c2 = arith.constant 2 : index
    %19 = memref.load %arg1[%c2] : memref<9xf32, #tpu.memory_space<smem>>
    %20 = vector.broadcast %19 : f32 to vector<8x128xf32>
    %21 = arith.mulf %20, %1 : vector<8x128xf32>
    %c3 = arith.constant 3 : index
    %22 = memref.load %arg1[%c3] : memref<9xf32, #tpu.memory_space<smem>>
    %23 = vector.broadcast %22 : f32 to vector<8x128xf32>
    %24 = arith.mulf %23, %3 : vector<8x128xf32>
    %25 = arith.addf %21, %24 : vector<8x128xf32>
    %c5 = arith.constant 5 : index
    %26 = memref.load %arg1[%c5] : memref<9xf32, #tpu.memory_space<smem>>
    %27 = vector.broadcast %26 : f32 to vector<8x128xf32>
    %28 = arith.addf %25, %27 : vector<8x128xf32>
    %29 = arith.negf %28 : vector<8x128xf32>
    %30 = math.exp %29 : vector<8x128xf32>
    %cst_6 = arith.constant 1.000000e+00 : f32
    %31 = vector.broadcast %cst_6 : f32 to vector<8x128xf32>
    %32 = arith.addf %31, %30 : vector<8x128xf32>
    %33 = arith.divf %31, %32 : vector<8x128xf32>
    %c6 = arith.constant 6 : index
    %34 = memref.load %arg1[%c6] : memref<9xf32, #tpu.memory_space<smem>>
    %35 = vector.broadcast %34 : f32 to vector<8x128xf32>
    %36 = arith.mulf %35, %18 : vector<8x128xf32>
    %c7 = arith.constant 7 : index
    %37 = memref.load %arg1[%c7] : memref<9xf32, #tpu.memory_space<smem>>
    %38 = vector.broadcast %37 : f32 to vector<8x128xf32>
    %39 = arith.mulf %38, %33 : vector<8x128xf32>
    %40 = arith.addf %36, %39 : vector<8x128xf32>
    %c8 = arith.constant 8 : index
    %41 = memref.load %arg1[%c8] : memref<9xf32, #tpu.memory_space<smem>>
    %42 = vector.broadcast %41 : f32 to vector<8x128xf32>
    %43 = arith.addf %40, %42 : vector<8x128xf32>
    %44 = arith.negf %43 : vector<8x128xf32>
    %45 = math.exp %44 : vector<8x128xf32>
    %cst_7 = arith.constant 1.000000e+00 : f32
    %46 = vector.broadcast %cst_7 : f32 to vector<8x128xf32>
    %47 = arith.addf %46, %45 : vector<8x128xf32>
    %48 = arith.divf %46, %47 : vector<8x128xf32>
    %c0_8 = arith.constant 0 : index
    %c0_9 = arith.constant 0 : index
    %49 = vector.load %arg3[%c0_8, %c0_9] : memref<8x128xf32, #tpu.memory_space<vmem>>, vector<8x128xf32>
    tpu.vector_store %arg3[%c0_8, %c0_9], %48 {strides = array<i32>} : memref<8x128xf32, #tpu.memory_space<vmem>>, vector<8x128xf32>,
    return
  }
  func.func @transform_0(%arg0: i32) -> i32 {
    %c0_i32 = arith.constant 0 : i32
    %c0_i32_0 = arith.constant 0 : i32
    return %c0_i32 : i32
  }
  func.func @transform_1(%arg0: i32) -> (i32, i32, i32) {
    %c0_i32 = arith.constant 0 : i32
    %c0_i32_0 = arith.constant 0 : i32
    %c0_i32_1 = arith.constant 0 : i32
    return %c0_i32, %arg0, %c0_i32_0 : i32, i32, i32
  }
  func.func @transform_2(%arg0: i32) -> (i32, i32) {
    %c0_i32 = arith.constant 0 : i32
    %c0_i32_0 = arith.constant 0 : i32
    return %arg0, %c0_i32 : i32, i32
  }
}

</mosaic_0001>

<llo_original>
// kernel: tpu_custom_call.1
$region0: #{tpu_custom_call.1}
  #allocation0 [shape = 'u32[]', space=smem, size = 0x4, offset = 0x4, fixed_abs, tag = 'smem constant byte address 0x4 - core index']
  #allocation1 [shape = 'u32[144,128]{1,0:T(1,128)}', space=vmem, size = 0x12000, scoped, tag = 'internal scratch']
  %s0 = inlined_call_operand.hbm [shape: f32[9], index: 0, kind: input, shape index: {}]
  %s1 = inlined_call_operand.hbm [shape: f32[2,8,128], index: 1, kind: input, shape index: {}]
  %s2 = inlined_call_operand.hbm [shape: f32[8,128], index: 2, kind: output, shape index: {}]
  %s3 = sld [smem:[#allocation0]]
  $region26: #{tpu_custom_call.1} parent=0
    _
  %s5 = ssub.s32 1, %s3
  %s6 = scalar_select 0, %s5, %s3
  $region1: #{tpu_custom_call.1} parent=0
    #allocation2 [shape = 'u8[512]{0}', space=smem, size = 0x200, scoped, tag = 'input window, operand 0, single buffered']
    #allocation3 [shape = 's32[1]{0}', space=sflag, size = 0x4, scoped, tag = 'scoped memory for tpu_custom_call.1']
    #allocation4 [shape = 's32[1]{0}', space=sflag, size = 0x4, scoped, tag = 'scoped memory for tpu_custom_call.1']
    #allocation5 [shape = 's32[1]{0}', space=sflag, size = 0x4, scoped, tag = 'scoped memory for tpu_custom_call.1']
    #allocation6 [shape = 'u8[8192]{0}', space=vmem, size = 0x2000, scoped, tag = 'input window, operand 1, single buffered']
    #allocation7 [shape = 'u8[4096]{0}', space=vmem, size = 0x1000, scoped, tag = 'output window, operand 0, single buffered']
    %7 = vsyncpa [#allocation5], 0
    %8 = vsyncpa [#allocation3], 0
    %9 = vsyncpa [#allocation4], 0
    // Predicated region
    $region2: #{tpu_custom_call.1} parent=1 // pred_check
      _
    $region3: #{tpu_custom_call.1} parent=1 // pred_check_branch
      %11 = sbr.rel (0) target = $region5
    $region4: #{tpu_custom_call.1} parent=1 // pred_region
      %s13 = ssub.s32 16, 16
      %14 = vsyncadd [#allocation5], %s13
      %17 = dma.hbm_to_smem %s0, 16, [#allocation2], [#allocation5]
    $region5: #{tpu_custom_call.1} parent=1 // pred_fallthru
      _
    // Predicated region
    $region6: #{tpu_custom_call.1} parent=1 // pred_check
      _
    $region7: #{tpu_custom_call.1} parent=1 // pred_check_branch
      %19 = sbr.rel (0) target = $region9
    $region8: #{tpu_custom_call.1} parent=1 // pred_region
      %s21 = ssub.s32 256, 256
      %22 = vsyncadd [#allocation3], %s21
      %s23 = sshll.u32 [#allocation6], 4
      %s24 = int_to_ptr.vmem [resolvable:$true] %s23
      %29 = dma.hbm_to_vmem [thread:$0]  %s1, 256, %s24, [#allocation3], 128, 128, 8
    $region9: #{tpu_custom_call.1} parent=1 // pred_fallthru
      _
    // Predicated region
    $region10: #{tpu_custom_call.1} parent=1 // pred_check
      _
    $region11: #{tpu_custom_call.1} parent=1 // pred_check_branch
      %31 = sbr.rel (0) target = $region13
    $region12: #{tpu_custom_call.1} parent=1 // pred_region
      %32 = dma.done [#allocation5], 16
    $region13: #{tpu_custom_call.1} parent=1 // pred_fallthru
      _
    // Predicated region
    $region14: #{tpu_custom_call.1} parent=1 // pred_check
      _
    $region15: #{tpu_custom_call.1} parent=1 // pred_check_branch
      %34 = sbr.rel (0) target = $region17
    $region16: #{tpu_custom_call.1} parent=1 // pred_region
      %35 = dma.done [#allocation3], 256
    $region17: #{tpu_custom_call.1} parent=1 // pred_fallthru
      _
    %36 = sfence
    %v37 = vld [vmem:[#allocation6] sm:$0xff]
    %s38 = scalar_lea.vmem [#allocation6], 8
    %v39 = vld [vmem:[%s38] sm:$0xff]
    %s40 = sld [smem:[#allocation2]]
    %v41 = vstv %s40
    %v42 = vmul.f32 %v41, %v37
    %s43 = sld [smem:[#allocation2 + $0x1]]
    %v44 = vstv %s43
    %v45 = vmul.f32 %v44, %v39
    %v46 = vadd.f32 %v42, %v45
    %s47 = sld [smem:[#allocation2 + $0x4]]
    %v48 = vstv %s47
    %v49 = vadd.f32 %v46, %v48
    %v50 = vxor.u32 %v49, 2147483648
    %v51 = vmul.f32 %v50, 1.442695
    %v52 = vpow.pop %v51
    %v53 = vadd.f32 %v52, 1.0
    %v54 = vrcp.pop %v53
    %v55 = vmul.f32 1.0, %v54
    %s56 = sld [smem:[#allocation2 + $0x2]]
    %v57 = vstv %s56
    %v58 = vmul.f32 %v57, %v37
    %s59 = sld [smem:[#allocation2 + $0x3]]
    %v60 = vstv %s59
    %v61 = vmul.f32 %v60, %v39
    %v62 = vadd.f32 %v58, %v61
    %s63 = sld [smem:[#allocation2 + $0x5]]
    %v64 = vstv %s63
    %v65 = vadd.f32 %v62, %v64
    %v66 = vxor.u32 %v65, 2147483648
    %v67 = vmul.f32 %v66, 1.442695
    %v68 = vpow.pop %v67
    %v69 = vadd.f32 %v68, 1.0
    %v70 = vrcp.pop %v69
    %v71 = vmul.f32 1.0, %v70
    %s72 = sld [smem:[#allocation2 + $0x6]]
    %v73 = vstv %s72
    %v74 = vmul.f32 %v73, %v55
    %s75 = sld [smem:[#allocation2 + $0x7]]
    %v76 = vstv %s75
    %v77 = vmul.f32 %v76, %v71
    %v78 = vadd.f32 %v74, %v77
    %s79 = sld [smem:[#allocation2 + $0x8]]
    %v80 = vstv %s79
    %v81 = vadd.f32 %v78, %v80
    %v82 = vxor.u32 %v81, 2147483648
    %v83 = vmul.f32 %v82, 1.442695
    %v84 = vpow.pop %v83
    %v85 = vadd.f32 %v84, 1.0
    %v86 = vrcp.pop %v85
    %v87 = vmul.f32 1.0, %v86
    %88 = vst [vmem:[#allocation7] sm:$0xff] %v87
    // Predicated region
    $region18: #{tpu_custom_call.1} parent=1 // pred_check
      _
    $region19: #{tpu_custom_call.1} parent=1 // pred_check_branch
      %90 = sbr.rel (0) target = $region21
    $region20: #{tpu_custom_call.1} parent=1 // pred_region
      %s92 = ssub.s32 128, 128
      %93 = vsyncadd [#allocation4], %s92
      %s95 = sshll.u32 [#allocation7], 4
      %s96 = int_to_ptr.vmem [resolvable:$true] %s95
      %98 = dma.vmem_to_hbm [thread:$0]  %s96, 128, %s2, [#allocation4]
    $region21: #{tpu_custom_call.1} parent=1 // pred_fallthru
      _
    // Predicated region
    $region22: #{tpu_custom_call.1} parent=1 // pred_check
      _
    $region23: #{tpu_custom_call.1} parent=1 // pred_check_branch
      %100 = sbr.rel (0) target = $region25
    $region24: #{tpu_custom_call.1} parent=1 // pred_region
      %101 = dma.done [#allocation4], 128
    $region25: #{tpu_custom_call.1} parent=1 // pred_fallthru
      _
    %102 = vsyncpa [#allocation3], 1
    %103 = vsyncpa [#allocation4], 1
    %104 = vsyncpa [#allocation5], 1

</llo_original>
